<compile_context>
chip_gen: v7x
topology: tpu7x:2x2x1
jax: 0.10.0
libtpu: 0.0.40
codegen_flags: <defaults>
</compile_context>

<pallas_src>
import jax
import jax.numpy as jnp
from jax.experimental import pallas as pl
from jax.experimental.pallas import tpu as pltpu


def _standard_norm_kernel(x_ref, scale_ref, bias_ref, o_ref):
    # One FMA per element with row-broadcast scale/bias. VPU has huge slack;
    # HBM bandwidth / DMA shape is the binding resource.
    o_ref[...] = x_ref[...] * scale_ref[...] + bias_ref[...]


def _round_up(a, b):
    return (a + b - 1) // b * b


def _vmem_capacity_bytes():
    try:
        info = pltpu.get_tpu_info()
        cap = getattr(info, "vmem_capacity_bytes", None)
        if cap:
            return int(cap)
    except Exception:
        pass
    return 64 << 20  # conservative fallback (v7x per-TC VMEM)


def _derive_tiles(rows, cols, itemsize):
    """Pick (row_tile, col_tile, vmem_limit_bytes) for a streaming elementwise kernel."""
    capacity = _vmem_capacity_bytes()
    # Live block footprint budget: (x tile + out tile) * double buffering; scale/bias are
    # negligible. <= 48 MiB keeps v7x (64 MiB/TC) safe; v5e/v6e have 128 MiB physical.
    tile_budget = min(48 << 20, capacity * 3 // 4)
    live_mult = 4 * itemsize  # bytes of live VMEM per tile element

    if rows < 8:
        row_cap = rows                      # block row dim == full array dim (always valid)
    else:
        row_cap = (rows // 8) * 8           # multiple of 8; edge blocks masked via cdiv grid

    if 8 * cols * live_mult <= tile_budget:
        # Preferred: full-width column tile -> contiguous per-block DMAs, fewer grid steps.
        col_tile = cols
        budget_rows = max(8, (tile_budget // (cols * live_mult)) // 8 * 8)
        row_tile = rows if rows < 8 else min(row_cap, budget_rows)
        # Guarantee >=2 grid steps along the (parallel) row axis when possible so both v7x
        # TensorCores get a share of this bandwidth-bound work (neutral on v5e/v6e).
        if rows > 8 and pl.cdiv(rows, row_tile) < 2:
            row_tile = max(8, _round_up(pl.cdiv(rows, 2), 8))
    else:
        # A full-width 8-row stripe is too large for VMEM: split the column axis instead.
        row_tile = rows if rows < 8 else 8
        budget_cols = max(128, (tile_budget // (8 * live_mult)) // 128 * 128)
        col_tile = min(max(128, (cols // 128) * 128), budget_cols)

    # Raise the scoped VMEM limit so large tiles are legal on v5e/v6e; keep headroom on v7x.
    vmem_limit = min(capacity * 7 // 8, tile_budget + (16 << 20))
    return row_tile, col_tile, int(vmem_limit)


def standard_norm(x, mean, std):
    """x: (N, C, H, W); mean, std: (C,). Returns (x - mean[c]) / std[c]."""
    N, C, H, W = x.shape
    rows = N * C
    cols = H * W
    itemsize = jnp.dtype(x.dtype).itemsize

    row_tile, col_tile, vmem_limit = _derive_tiles(rows, cols, itemsize)

    # ---- Tiny wrapper-side glue (never touches x beyond a zero-copy reshape) ----
    x2d = x.reshape(rows, cols)
    scale_c = (1.0 / std).astype(x.dtype)        # exact f32 reciprocal on the (C,) array
    bias_c = (-mean / std).astype(x.dtype)
    scale_rows = jnp.tile(scale_c, N).reshape(rows, 1)   # row n*C + c -> channel c
    bias_rows = jnp.tile(bias_c, N).reshape(rows, 1)

    grid = (pl.cdiv(rows, row_tile), pl.cdiv(cols, col_tile))

    out2d = pl.pallas_call(
        _standard_norm_kernel,
        out_shape=jax.ShapeDtypeStruct((rows, cols), x.dtype),
        grid_spec=pl.GridSpec(
            grid=grid,
            in_specs=[
                pl.BlockSpec((row_tile, col_tile), lambda i, j: (i, j)),
                # Column axis is the innermost grid dim and scale/bias block index is
                # (i, 0): the tiny blocks stay resident across the inner loop (no re-DMA).
                pl.BlockSpec((row_tile, 1), lambda i, j: (i, 0)),
                pl.BlockSpec((row_tile, 1), lambda i, j: (i, 0)),
            ],
            out_specs=pl.BlockSpec((row_tile, col_tile), lambda i, j: (i, j)),
        ),
        compiler_params=pltpu.CompilerParams(
            dimension_semantics=("parallel", "parallel"),
            vmem_limit_bytes=vmem_limit,
        ),
        cost_estimate=pl.CostEstimate(
            flops=2 * rows * cols,
            transcendentals=0,
            bytes_accessed=2 * rows * cols * itemsize,
        ),
    )(x2d, scale_rows, bias_rows)

    return out2d.reshape(N, C, H, W)


if __name__ == "__main__":
    key = jax.random.PRNGKey(0)
    kx, km, ks = jax.random.split(key, 3)

    N, C, H, W = 2, 4, 16, 16
    x = jax.random.normal(kx, (N, C, H, W), dtype=jnp.float32)
    # Deterministic synthetic per-channel statistics (std kept strictly positive).
    mean = jax.random.normal(km, (C,), dtype=jnp.float32)
    std = jax.random.uniform(ks, (C,), dtype=jnp.float32, minval=0.5, maxval=2.0)

    y = standard_norm(x, mean, std)
    y = jax.block_until_ready(y)

    # Reference check against plain JAX broadcasting (NCHW semantics).
    y_ref = (x - mean[None, :, None, None]) / std[None, :, None, None]
    assert jnp.allclose(y, y_ref, atol=1e-5, rtol=1e-5), "mismatch vs reference"

    print("KERNEL_OK")
</pallas_src>

<mosaic_0001>
module attributes {stable_mosaic.version = 11 : i64} {
  func.func @_standard_norm_kernel(%arg0: i32, %arg1: i32, %arg2: memref<8x256xf32, #tpu.memory_space<vmem>>, %arg3: memref<8x1xf32, #tpu.memory_space<vmem>>, %arg4: memref<8x1xf32, #tpu.memory_space<vmem>>, %arg5: memref<8x256xf32, #tpu.memory_space<vmem>>) attributes {dimension_semantics = [#tpu.dimension_semantics<parallel>, #tpu.dimension_semantics<parallel>], iteration_bounds = array<i64: 1, 1>, scalar_prefetch = 0 : i64, scratch_operands = 0 : i64, tpu.core_type = #tpu.core_type<tc>, window_params = [{transform_indices = @transform_0, window_bounds = array<i64: 8, 256>}, {transform_indices = @transform_1, window_bounds = array<i64: 8, 1>}, {transform_indices = @transform_2, window_bounds = array<i64: 8, 1>}, {transform_indices = @transform_3, window_bounds = array<i64: 8, 256>}]} {
    %c0 = arith.constant 0 : index
    %c0_0 = arith.constant 0 : index
    %0 = vector.load %arg2[%c0, %c0_0] : memref<8x256xf32, #tpu.memory_space<vmem>>, vector<8x256xf32>
    %c0_1 = arith.constant 0 : index
    %c0_2 = arith.constant 0 : index
    %1 = vector.load %arg3[%c0_1, %c0_2] : memref<8x1xf32, #tpu.memory_space<vmem>>, vector<8x1xf32>
    %2 = vector.broadcast %1 : vector<8x1xf32> to vector<8x256xf32>
    %3 = arith.mulf %0, %2 : vector<8x256xf32>
    %c0_3 = arith.constant 0 : index
    %c0_4 = arith.constant 0 : index
    %4 = vector.load %arg4[%c0_3, %c0_4] : memref<8x1xf32, #tpu.memory_space<vmem>>, vector<8x1xf32>
    %5 = vector.broadcast %4 : vector<8x1xf32> to vector<8x256xf32>
    %6 = arith.addf %3, %5 : vector<8x256xf32>
    %c0_5 = arith.constant 0 : index
    %c0_6 = arith.constant 0 : index
    %7 = vector.load %arg5[%c0_5, %c0_6] : memref<8x256xf32, #tpu.memory_space<vmem>>, vector<8x256xf32>
    tpu.vector_store %arg5[%c0_5, %c0_6], %6 {strides = array<i32>} : memref<8x256xf32, #tpu.memory_space<vmem>>, vector<8x256xf32>,
    return
  }
  func.func @transform_0(%arg0: i32, %arg1: i32) -> (i32, i32) {
    %c0_i32 = arith.constant 0 : i32
    return %arg0, %arg1 : i32, i32
  }
  func.func @transform_1(%arg0: i32, %arg1: i32) -> (i32, i32) {
    %c0_i32 = arith.constant 0 : i32
    %c0_i32_0 = arith.constant 0 : i32
    return %arg0, %c0_i32 : i32, i32
  }
  func.func @transform_2(%arg0: i32, %arg1: i32) -> (i32, i32) {
    %c0_i32 = arith.constant 0 : i32
    %c0_i32_0 = arith.constant 0 : i32
    return %arg0, %c0_i32 : i32, i32
  }
  func.func @transform_3(%arg0: i32, %arg1: i32) -> (i32, i32) {
    %c0_i32 = arith.constant 0 : i32
    return %arg0, %arg1 : i32, i32
  }
}

</mosaic_0001>

<llo_original>
// kernel: tpu_custom_call.1
$region0: #{tpu_custom_call.1}
  #allocation0 [shape = 'u32[]', space=smem, size = 0x4, offset = 0x4, fixed_abs, tag = 'smem constant byte address 0x4 - core index']
  #allocation1 [shape = 'u32[144,128]{1,0:T(1,128)}', space=vmem, size = 0x12000, scoped, tag = 'internal scratch']
  %s0 = inlined_call_operand.vmem [shape: f32[8,256], index: 0, kind: input, shape index: {}]
  %s1 = inlined_call_operand.vmem [shape: f32[8,1], index: 1, kind: input, shape index: {}]
  %s2 = inlined_call_operand.vmem [shape: f32[8,1], index: 2, kind: input, shape index: {}]
  %s3 = inlined_call_operand.hbm [shape: f32[8,256], index: 3, kind: output, shape index: {}]
  %s4 = sld [smem:[#allocation0]]
  $region22: #{tpu_custom_call.1} parent=0
    _
  %s6 = ssub.s32 1, %s4
  %s7 = scalar_select 0, %s6, %s4
  $region1: #{tpu_custom_call.1} parent=0
    #allocation2 [shape = 'u8[8192]{0}', space=vmem, size = 0x2000, scoped, tag = 'output window, operand 0, single buffered']
    #allocation3 [shape = 's32[1]{0}', space=sflag, size = 0x4, scoped, tag = 'scoped memory for tpu_custom_call.1']
    %8 = vsyncpa [#allocation3], 0
    // Predicated region
    $region2: #{tpu_custom_call.1} parent=1 // pred_check
      _
    $region3: #{tpu_custom_call.1} parent=1 // pred_check_branch
      %10 = sbr.rel (0) target = $region5
    $region4: #{tpu_custom_call.1} parent=1 // pred_region
      _
    $region5: #{tpu_custom_call.1} parent=1 // pred_fallthru
      _
    // Predicated region
    $region6: #{tpu_custom_call.1} parent=1 // pred_check
      _
    $region7: #{tpu_custom_call.1} parent=1 // pred_check_branch
      %12 = sbr.rel (0) target = $region9
    $region8: #{tpu_custom_call.1} parent=1 // pred_region
      _
    $region9: #{tpu_custom_call.1} parent=1 // pred_fallthru
      _
    // Predicated region
    $region10: #{tpu_custom_call.1} parent=1 // pred_check
      _
    $region11: #{tpu_custom_call.1} parent=1 // pred_check_branch
      %14 = sbr.rel (0) target = $region13
    $region12: #{tpu_custom_call.1} parent=1 // pred_region
      _
    $region13: #{tpu_custom_call.1} parent=1 // pred_fallthru
      _
    %v15 = vld [vmem:[%s0] sm:$0xff]
    %v16 = vld [vmem:[%s0 + $0x8] sm:$0xff]
    %v17 = vld [vmem:[%s1] sm:$0xff]
    %19 = vset.pattern.permute.xlu0 0
    %20 = vperm.xlu0 %19, %v17
    %v21 = vpop.permute.xlu0 %20
    %v23 = vmul.f32 %v15, %v21
    %v24 = vmul.f32 %v16, %v21
    %v25 = vld [vmem:[%s2] sm:$0xff]
    %27 = vset.pattern.permute.xlu0 0
    %28 = vperm.xlu0 %27, %v25
    %v29 = vpop.permute.xlu0 %28
    %v31 = vadd.f32 %v23, %v29
    %v32 = vadd.f32 %v24, %v29
    %33 = vst [vmem:[#allocation2] sm:$0xff] %v31
    %34 = vst [vmem:[#allocation2 + $0x8] sm:$0xff] %v32
    // Predicated region
    $region14: #{tpu_custom_call.1} parent=1 // pred_check
      _
    $region15: #{tpu_custom_call.1} parent=1 // pred_check_branch
      %36 = sbr.rel (0) target = $region17
    $region16: #{tpu_custom_call.1} parent=1 // pred_region
      %s38 = ssub.s32 256, 256
      %39 = vsyncadd [#allocation3], %s38
      %s41 = sshll.u32 [#allocation2], 4
      %s42 = int_to_ptr.vmem [resolvable:$true] %s41
      %44 = dma.vmem_to_hbm [thread:$0]  %s42, 256, %s3, [#allocation3]
    $region17: #{tpu_custom_call.1} parent=1 // pred_fallthru
      _
    // Predicated region
    $region18: #{tpu_custom_call.1} parent=1 // pred_check
      _
    $region19: #{tpu_custom_call.1} parent=1 // pred_check_branch
      %46 = sbr.rel (0) target = $region21
    $region20: #{tpu_custom_call.1} parent=1 // pred_region
      %47 = dma.done [#allocation3], 256
    $region21: #{tpu_custom_call.1} parent=1 // pred_fallthru
      _
    %48 = vsyncpa [#allocation3], 1

</llo_original>
